<compile_context>
chip_gen: v5e
topology: v5e:2x2
jax: 0.10.0
libtpu: 0.0.40
codegen_flags: <defaults>
</compile_context>

<pallas_src>
import functools

import jax
import jax.numpy as jnp
from jax.experimental import pallas as pl
from jax.experimental.pallas import tpu as pltpu


# ----------------------------------------------------------------------------
# Kernels
# ----------------------------------------------------------------------------
def _act_layer(acc_f32, bias, act_dtype):
    """bias + ReLU epilogue; MXU accumulator is f32, epilogue runs in act_dtype."""
    return jnp.maximum(acc_f32.astype(act_dtype) + bias, 0.0)


def _rmlp_tower(x_mxu, w_in, b_in, w_mlp_ref, b_mlp_ref, depth, mxu_dtype,
                act_dtype):
    """z = x1 + x2 where x1 = ReLU(x@Win+bin), x2 = depth x (Linear+ReLU)(x1)."""
    x1 = _act_layer(
        jnp.dot(x_mxu, w_in, preferred_element_type=jnp.float32), b_in, act_dtype)
    x2 = x1
    for d in range(depth):  # depth is static -> unrolled at trace time
        x2 = _act_layer(
            jnp.dot(x2.astype(mxu_dtype), w_mlp_ref[d],
                    preferred_element_type=jnp.float32),
            b_mlp_ref[d], act_dtype)
    return x1 + x2


def _rmlp_kernel(x_ref, w_in_ref, b_in_ref, w_mlp_ref, b_mlp_ref, o_ref, *,
                 depth, mxu_dtype, act_dtype):
    """forward(x) = x1 + x2 (one batch tile)."""
    x = x_ref[...].astype(mxu_dtype)          # in-kernel cast, no wrapper copy
    z = _rmlp_tower(x, w_in_ref[...], b_in_ref[...], w_mlp_ref, b_mlp_ref,
                    depth, mxu_dtype, act_dtype)
    o_ref[...] = z.astype(o_ref.dtype)


def _siamese_kernel(x_ref, xr_ref, w_in_ref, b_in_ref, w_mlp_ref, b_mlp_ref,
                    w_s1a_ref, w_s1b_ref, b_s1_ref, w_s2_ref, b_s2_ref,
                    o_ref, xpair_ref, *, depth, mxu_dtype, act_dtype):
    """Fused siamese_forward: one batch-stacked tower pass + siamese head."""
    blk = x_ref.shape[0]

    # Stack x / x_ref along the batch (sublane) axis so the shared-weight tower
    # runs ONCE on 2*blk rows (half the tower dots, double the MXU M).
    xpair_ref[pl.ds(0, blk), :] = x_ref[...]
    xpair_ref[pl.ds(blk, blk), :] = xr_ref[...]
    xb = xpair_ref[...].astype(mxu_dtype)

    z = _rmlp_tower(xb, w_in_ref[...], b_in_ref[...], w_mlp_ref, b_mlp_ref,
                    depth, mxu_dtype, act_dtype)
    z_x = z[:blk]
    z_r = z[blk:]

    # concat([z_x, z_r], -1) @ w_s1  ==  z_x @ w_s1[:W] + z_r @ w_s1[W:]
    h = _act_layer(
        jnp.dot(z_x.astype(mxu_dtype), w_s1a_ref[...],
                preferred_element_type=jnp.float32)
        + jnp.dot(z_r.astype(mxu_dtype), w_s1b_ref[...],
                  preferred_element_type=jnp.float32),
        b_s1_ref[...], act_dtype)

    o_ref[...] = (
        jnp.dot(h.astype(mxu_dtype), w_s2_ref[...],
                preferred_element_type=jnp.float32)
        + b_s2_ref[...]).astype(o_ref.dtype)


# ----------------------------------------------------------------------------
# One-time parameter preparation (hoisted out of the per-call wrappers)
# ----------------------------------------------------------------------------
def _round_up(n, m):
    return (n + m - 1) // m * m


def _default_bf16_act():
    """bf16 bias+ReLU epilogue only on chips with a bf16 VPU (v6e / v7x)."""
    try:
        kind = jax.devices()[0].device_kind.lower()
    except Exception:
        return False
    if "tpu" not in kind:
        return False
    for old in ("v2", "v3", "v4", "v5"):
        if old in kind:
            return False
    return True


def prepare_params(params, *, mxu_dtype=jnp.bfloat16, bf16_act=None):
    """Casts/splits/pads weights once so repeated calls do no per-call HBM prep."""
    if bf16_act is None:
        bf16_act = _default_bf16_act()
    act_dtype = jnp.bfloat16 if bf16_act else jnp.float32

    in_features, width = params["w_in"].shape
    depth = params["w_mlp"].shape[0]
    out_features = params["w_s2"].shape[1]
    out_pad = _round_up(out_features, 128)     # lane-dense siamese output

    w_s2 = params["w_s2"].astype(mxu_dtype)
    b_s2 = params["b_s2"].astype(jnp.float32)
    if out_pad != out_features:
        w_s2 = jnp.pad(w_s2, ((0, 0), (0, out_pad - out_features)))
        b_s2 = jnp.pad(b_s2, ((0, 0), (0, out_pad - out_features)))

    return {
        "mxu_dtype": mxu_dtype, "act_dtype": act_dtype,
        "in_features": in_features, "width": width, "depth": depth,
        "out_features": out_features, "out_pad": out_pad,
        "w_in": params["w_in"].astype(mxu_dtype),
        "b_in": params["b_in"].astype(act_dtype),
        "w_mlp": params["w_mlp"].astype(mxu_dtype),
        "b_mlp": params["b_mlp"].astype(act_dtype),
        "w_s1a": params["w_s1"][:width].astype(mxu_dtype),   # acts on z_x
        "w_s1b": params["w_s1"][width:].astype(mxu_dtype),   # acts on z_ref
        "b_s1": params["b_s1"].astype(act_dtype),
        "w_s2": w_s2, "b_s2": b_s2,
    }


def _pick_block(batch, block_b):
    """Batch tile (multiple of 128). Guarantees >=2 grid steps when batch>=256
    so the 'parallel' axis can shard across v7x's two TensorCores."""
    block = min(block_b, _round_up(batch, 128))
    if batch >= 256:
        block = min(block, max(128, _round_up(pl.cdiv(batch, 2), 128)))
    return block


# ----------------------------------------------------------------------------
# Wrappers
# ----------------------------------------------------------------------------
def rmlp_forward(x, prep, *, block_b=1024):
    """Pallas version of ConcatSiameseRMLP.forward (eval mode)."""
    B, F = x.shape
    width, depth = prep["width"], prep["depth"]
    mxu_dtype, act_dtype = prep["mxu_dtype"], prep["act_dtype"]
    block = _pick_block(B, block_b)
    grid = pl.cdiv(B, block)

    flops = 2 * B * (F * width + depth * width * width) \
        + 4 * B * width * (depth + 1)
    bytes_accessed = int(
        x.size * x.dtype.itemsize
        + prep["w_in"].size * prep["w_in"].dtype.itemsize
        + prep["w_mlp"].size * prep["w_mlp"].dtype.itemsize
        + (prep["b_in"].size + prep["b_mlp"].size) * 4
        + B * width * 4)

    kernel = functools.partial(_rmlp_kernel, depth=depth,
                               mxu_dtype=mxu_dtype, act_dtype=act_dtype)
    return pl.pallas_call(
        kernel,
        out_shape=jax.ShapeDtypeStruct((B, width), jnp.float32),
        grid=(grid,),
        in_specs=[
            pl.BlockSpec((block, F), lambda i: (i, 0)),                 # x tile
            pl.BlockSpec((F, width), lambda i: (0, 0)),                 # W_in
            pl.BlockSpec((1, width), lambda i: (0, 0)),                 # b_in
            pl.BlockSpec((depth, width, width), lambda i: (0, 0, 0)),   # W_mlp
            pl.BlockSpec((depth, 1, width), lambda i: (0, 0, 0)),       # b_mlp
        ],
        out_specs=pl.BlockSpec((block, width), lambda i: (i, 0)),
        compiler_params=pltpu.CompilerParams(dimension_semantics=("parallel",)),
        cost_estimate=pl.CostEstimate(flops=int(flops), transcendentals=0,
                                      bytes_accessed=bytes_accessed),
    )(x, prep["w_in"], prep["b_in"], prep["w_mlp"], prep["b_mlp"])


def siamese_forward(x, x_ref, prep, *, block_b=1024):
    """Pallas version of ConcatSiameseRMLP.siamese_forward (single fused kernel)."""
    assert x.shape == x_ref.shape
    B, F = x.shape
    width, depth = prep["width"], prep["depth"]
    out_features, out_pad = prep["out_features"], prep["out_pad"]
    mxu_dtype, act_dtype = prep["mxu_dtype"], prep["act_dtype"]
    block = _pick_block(B, block_b)
    grid = pl.cdiv(B, block)

    flops = (4 * B * (F * width + depth * width * width)
             + 2 * B * (2 * width * width + width * out_pad)
             + 8 * B * width * (depth + 2))
    weight_bytes = sum(int(prep[k].size * prep[k].dtype.itemsize)
                       for k in ("w_in", "w_mlp", "w_s1a", "w_s1b", "w_s2",
                                 "b_in", "b_mlp", "b_s1", "b_s2"))
    bytes_accessed = int(2 * x.size * x.dtype.itemsize + weight_bytes
                         + B * out_pad * 4)

    kernel = functools.partial(_siamese_kernel, depth=depth,
                               mxu_dtype=mxu_dtype, act_dtype=act_dtype)
    out = pl.pallas_call(
        kernel,
        out_shape=jax.ShapeDtypeStruct((B, out_pad), jnp.float32),
        grid=(grid,),
        in_specs=[
            pl.BlockSpec((block, F), lambda i: (i, 0)),                 # x tile
            pl.BlockSpec((block, F), lambda i: (i, 0)),                 # x_ref tile
            pl.BlockSpec((F, width), lambda i: (0, 0)),                 # W_in
            pl.BlockSpec((1, width), lambda i: (0, 0)),                 # b_in
            pl.BlockSpec((depth, width, width), lambda i: (0, 0, 0)),   # W_mlp
            pl.BlockSpec((depth, 1, width), lambda i: (0, 0, 0)),       # b_mlp
            pl.BlockSpec((width, width), lambda i: (0, 0)),             # W_s1 top
            pl.BlockSpec((width, width), lambda i: (0, 0)),             # W_s1 bottom
            pl.BlockSpec((1, width), lambda i: (0, 0)),                 # b_s1
            pl.BlockSpec((width, out_pad), lambda i: (0, 0)),           # W_s2 (lane-padded)
            pl.BlockSpec((1, out_pad), lambda i: (0, 0)),               # b_s2 (lane-padded)
        ],
        out_specs=pl.BlockSpec((block, out_pad), lambda i: (i, 0)),
        scratch_shapes=[pltpu.VMEM((2 * block, F), x.dtype)],           # [x ; x_ref] slab
        compiler_params=pltpu.CompilerParams(dimension_semantics=("parallel",)),
        cost_estimate=pl.CostEstimate(flops=int(flops), transcendentals=0,
                                      bytes_accessed=bytes_accessed),
    )(x, x_ref, prep["w_in"], prep["b_in"], prep["w_mlp"], prep["b_mlp"],
      prep["w_s1a"], prep["w_s1b"], prep["b_s1"], prep["w_s2"], prep["b_s2"])

    if out_pad != out_features:
        out = out[:, :out_features]
    return out


# ----------------------------------------------------------------------------
# References (mirror the PyTorch module in eval mode)
# ----------------------------------------------------------------------------
def ref_forward(x, p):
    """Pure f32 module semantics."""
    x1 = jnp.maximum(x @ p["w_in"] + p["b_in"], 0.0)
    x2 = x1
    for d in range(p["w_mlp"].shape[0]):
        x2 = jnp.maximum(x2 @ p["w_mlp"][d] + p["b_mlp"][d], 0.0)
    return x1 + x2


def ref_siamese_forward(x, x_ref, p):
    b = x.shape[0]
    z = ref_forward(jnp.concatenate([x, x_ref], axis=0), p)
    zc = jnp.concatenate([z[:b], z[b:]], axis=-1)
    h = jnp.maximum(zc @ p["w_s1"] + p["b_s1"], 0.0)
    return h @ p["w_s2"] + p["b_s2"]


def ref_forward_matched(x, p, mxu_dtype, act_dtype):
    """Bit-matched reference: bf16 MXU inputs, f32 accumulate, act_dtype epilogue."""
    def mm(a, w):
        return jnp.dot(a.astype(mxu_dtype), w.astype(mxu_dtype),
                       preferred_element_type=jnp.float32)
    def act(acc, b):
        return jnp.maximum(acc.astype(act_dtype) + b.astype(act_dtype), 0.0)
    x1 = act(mm(x, p["w_in"]), p["b_in"])
    x2 = x1
    for d in range(p["w_mlp"].shape[0]):
        x2 = act(mm(x2, p["w_mlp"][d]), p["b_mlp"][d])
    return x1 + x2


def ref_siamese_matched(x, x_ref, p, mxu_dtype, act_dtype):
    def mm(a, w):
        return jnp.dot(a.astype(mxu_dtype), w.astype(mxu_dtype),
                       preferred_element_type=jnp.float32)
    width = p["w_in"].shape[1]
    z_x = ref_forward_matched(x, p, mxu_dtype, act_dtype)
    z_r = ref_forward_matched(x_ref, p, mxu_dtype, act_dtype)
    h = jnp.maximum(
        (mm(z_x, p["w_s1"][:width]) + mm(z_r, p["w_s1"][width:])).astype(act_dtype)
        + p["b_s1"].astype(act_dtype), 0.0)
    return mm(h, p["w_s2"]) + p["b_s2"]


# ----------------------------------------------------------------------------
# Deterministic parameter init (weights stored as (in, out))
# ----------------------------------------------------------------------------
def init_params(key, in_features, out_features, depth, width):
    ks = jax.random.split(key, 8)
    scale = 0.1
    return {
        "w_in": scale * jax.random.normal(ks[0], (in_features, width), jnp.float32),
        "b_in": scale * jax.random.normal(ks[1], (1, width), jnp.float32),
        "w_mlp": scale * jax.random.normal(ks[2], (depth, width, width), jnp.float32),
        "b_mlp": scale * jax.random.normal(ks[3], (depth, 1, width), jnp.float32),
        "w_s1": scale * jax.random.normal(ks[4], (2 * width, width), jnp.float32),
        "b_s1": scale * jax.random.normal(ks[5], (1, width), jnp.float32),
        "w_s2": scale * jax.random.normal(ks[6], (width, out_features), jnp.float32),
        "b_s2": scale * jax.random.normal(ks[7], (1, out_features), jnp.float32),
    }


# ----------------------------------------------------------------------------
if __name__ == "__main__":
    in_features, out_features, depth, width = 16, 8, 3, 32

    key = jax.random.PRNGKey(0)
    k_p, k_x, k_xr, k_x2, k_xr2 = jax.random.split(key, 5)
    params = init_params(k_p, in_features, out_features, depth, width)
    prep = prepare_params(params)          # one-time weight cast / split / pad
    mxu_dtype, act_dtype = prep["mxu_dtype"], prep["act_dtype"]

    # --- small batch ---------------------------------------------------------
    batch = 8
    x = jax.random.normal(k_x, (batch, in_features), jnp.float32)
    x_refin = jax.random.normal(k_xr, (batch, in_features), jnp.float32)

    y = jax.block_until_ready(rmlp_forward(x, prep))
    s = jax.block_until_ready(siamese_forward(x, x_refin, prep))

    assert y.shape == (batch, width)
    assert s.shape == (batch, out_features)
    # Tight check against bit-matched (bf16 MXU input, f32 accumulate) reference.
    assert jnp.allclose(y, ref_forward_matched(x, params, mxu_dtype, act_dtype),
                        atol=2e-3, rtol=2e-3), "forward mismatch"
    assert jnp.allclose(s, ref_siamese_matched(x, x_refin, params, mxu_dtype, act_dtype),
                        atol=2e-3, rtol=2e-3), "siamese mismatch"
    # Loose sanity check against pure-f32 module semantics.
    assert jnp.allclose(y, ref_forward(x, params), atol=1e-1, rtol=1e-1)
    assert jnp.allclose(s, ref_siamese_forward(x, x_refin, params), atol=1e-1, rtol=1e-1)

    # --- ragged multi-step batch (exercises grid > 1 and the ragged tail) ----
    batch2 = 300
    x2 = jax.random.normal(k_x2, (batch2, in_features), jnp.float32)
    xr2 = jax.random.normal(k_xr2, (batch2, in_features), jnp.float32)

    y2 = jax.block_until_ready(rmlp_forward(x2, prep, block_b=128))
    s2 = jax.block_until_ready(siamese_forward(x2, xr2, prep, block_b=128))

    assert y2.shape == (batch2, width)
    assert s2.shape == (batch2, out_features)
    assert jnp.allclose(y2, ref_forward_matched(x2, params, mxu_dtype, act_dtype),
                        atol=2e-3, rtol=2e-3), "ragged forward mismatch"
    assert jnp.allclose(s2, ref_siamese_matched(x2, xr2, params, mxu_dtype, act_dtype),
                        atol=2e-3, rtol=2e-3), "ragged siamese mismatch"

    print("KERNEL_OK")
</pallas_src>

<mosaic_0001>
module attributes {stable_mosaic.version = 11 : i64} {
  func.func @_rmlp_kernel(%arg0: i32, %arg1: memref<128x16xf32, #tpu.memory_space<vmem>>, %arg2: memref<16x32xbf16, #tpu.memory_space<vmem>>, %arg3: memref<1x32xf32, #tpu.memory_space<vmem>>, %arg4: memref<3x32x32xbf16, #tpu.memory_space<vmem>>, %arg5: memref<3x1x32xf32, #tpu.memory_space<vmem>>, %arg6: memref<128x32xf32, #tpu.memory_space<vmem>>) attributes {dimension_semantics = [#tpu.dimension_semantics<parallel>], iteration_bounds = array<i64: 1>, scalar_prefetch = 0 : i64, scratch_operands = 0 : i64, tpu.core_type = #tpu.core_type<tc>, window_params = [{transform_indices = @transform_0, window_bounds = array<i64: 128, 16>}, {pipeline_mode = #tpu.pipeline_mode<synchronous>, transform_indices = @transform_1, window_bounds = array<i64: 16, 32>}, {pipeline_mode = #tpu.pipeline_mode<synchronous>, transform_indices = @transform_2, window_bounds = array<i64: 1, 32>}, {pipeline_mode = #tpu.pipeline_mode<synchronous>, transform_indices = @transform_3, window_bounds = array<i64: 3, 32, 32>}, {pipeline_mode = #tpu.pipeline_mode<synchronous>, transform_indices = @transform_4, window_bounds = array<i64: 3, 1, 32>}, {transform_indices = @transform_5, window_bounds = array<i64: 128, 32>}]} {
    %c0 = arith.constant 0 : index
    %c0_0 = arith.constant 0 : index
    %0 = vector.load %arg1[%c0, %c0_0] : memref<128x16xf32, #tpu.memory_space<vmem>>, vector<128x16xf32>
    %1 = arith.truncf %0 : vector<128x16xf32> to vector<128x16xbf16>
    %c0_1 = arith.constant 0 : index
    %c0_2 = arith.constant 0 : index
    %2 = vector.load %arg2[%c0_1, %c0_2] : memref<16x32xbf16, #tpu.memory_space<vmem>>, vector<16x32xbf16>
    %c0_3 = arith.constant 0 : index
    %c0_4 = arith.constant 0 : index
    %3 = vector.load %arg3[%c0_3, %c0_4] : memref<1x32xf32, #tpu.memory_space<vmem>>, vector<1x32xf32>
    %cst = arith.constant dense<0.000000e+00> : vector<128x32xf32>
    %4 = tpu.matmul %1, %2, %cst {dimension_numbers = #tpu.dot_dimension_numbers<[1], [0], [0], [1], [0, 0, 1, 1], [], []>} : vector<128x16xbf16>, vector<16x32xbf16>, vector<128x32xf32> -> vector<128x32xf32>
    %5 = vector.broadcast %3 : vector<1x32xf32> to vector<128x32xf32>
    %6 = arith.addf %4, %5 : vector<128x32xf32>
    %cst_5 = arith.constant 0.000000e+00 : f32
    %7 = vector.broadcast %cst_5 : f32 to vector<128x32xf32>
    %8 = arith.maximumf %6, %7 : vector<128x32xf32>
    %9 = arith.truncf %8 : vector<128x32xf32> to vector<128x32xbf16>
    %c0_6 = arith.constant 0 : index
    %c0_7 = arith.constant 0 : index
    %c0_8 = arith.constant 0 : index
    %10 = vector.load %arg4[%c0_6, %c0_7, %c0_8] : memref<3x32x32xbf16, #tpu.memory_space<vmem>>, vector<1x32x32xbf16>
    %11 = vector.shape_cast %10 : vector<1x32x32xbf16> to vector<32x32xbf16>
    %cst_9 = arith.constant dense<0.000000e+00> : vector<128x32xf32>
    %12 = tpu.matmul %9, %11, %cst_9 {dimension_numbers = #tpu.dot_dimension_numbers<[1], [0], [0], [1], [0, 0, 1, 1], [], []>} : vector<128x32xbf16>, vector<32x32xbf16>, vector<128x32xf32> -> vector<128x32xf32>
    %c0_10 = arith.constant 0 : index
    %c0_11 = arith.constant 0 : index
    %c0_12 = arith.constant 0 : index
    %13 = vector.load %arg5[%c0_10, %c0_11, %c0_12] : memref<3x1x32xf32, #tpu.memory_space<vmem>>, vector<1x1x32xf32>
    %14 = vector.shape_cast %13 : vector<1x1x32xf32> to vector<1x32xf32>
    %15 = vector.broadcast %14 : vector<1x32xf32> to vector<128x32xf32>
    %16 = arith.addf %12, %15 : vector<128x32xf32>
    %cst_13 = arith.constant 0.000000e+00 : f32
    %17 = vector.broadcast %cst_13 : f32 to vector<128x32xf32>
    %18 = arith.maximumf %16, %17 : vector<128x32xf32>
    %19 = arith.truncf %18 : vector<128x32xf32> to vector<128x32xbf16>
    %c1 = arith.constant 1 : index
    %c0_14 = arith.constant 0 : index
    %c0_15 = arith.constant 0 : index
    %20 = vector.load %arg4[%c1, %c0_14, %c0_15] : memref<3x32x32xbf16, #tpu.memory_space<vmem>>, vector<1x32x32xbf16>
    %21 = vector.shape_cast %20 : vector<1x32x32xbf16> to vector<32x32xbf16>
    %cst_16 = arith.constant dense<0.000000e+00> : vector<128x32xf32>
    %22 = tpu.matmul %19, %21, %cst_16 {dimension_numbers = #tpu.dot_dimension_numbers<[1], [0], [0], [1], [0, 0, 1, 1], [], []>} : vector<128x32xbf16>, vector<32x32xbf16>, vector<128x32xf32> -> vector<128x32xf32>
    %c1_17 = arith.constant 1 : index
    %c0_18 = arith.constant 0 : index
    %c0_19 = arith.constant 0 : index
    %23 = vector.load %arg5[%c1_17, %c0_18, %c0_19] : memref<3x1x32xf32, #tpu.memory_space<vmem>>, vector<1x1x32xf32>
    %24 = vector.shape_cast %23 : vector<1x1x32xf32> to vector<1x32xf32>
    %25 = vector.broadcast %24 : vector<1x32xf32> to vector<128x32xf32>
    %26 = arith.addf %22, %25 : vector<128x32xf32>
    %cst_20 = arith.constant 0.000000e+00 : f32
    %27 = vector.broadcast %cst_20 : f32 to vector<128x32xf32>
    %28 = arith.maximumf %26, %27 : vector<128x32xf32>
    %29 = arith.truncf %28 : vector<128x32xf32> to vector<128x32xbf16>
    %c2 = arith.constant 2 : index
    %c0_21 = arith.constant 0 : index
    %c0_22 = arith.constant 0 : index
    %30 = vector.load %arg4[%c2, %c0_21, %c0_22] : memref<3x32x32xbf16, #tpu.memory_space<vmem>>, vector<1x32x32xbf16>
    %31 = vector.shape_cast %30 : vector<1x32x32xbf16> to vector<32x32xbf16>
    %cst_23 = arith.constant dense<0.000000e+00> : vector<128x32xf32>
    %32 = tpu.matmul %29, %31, %cst_23 {dimension_numbers = #tpu.dot_dimension_numbers<[1], [0], [0], [1], [0, 0, 1, 1], [], []>} : vector<128x32xbf16>, vector<32x32xbf16>, vector<128x32xf32> -> vector<128x32xf32>
    %c2_24 = arith.constant 2 : index
    %c0_25 = arith.constant 0 : index
    %c0_26 = arith.constant 0 : index
    %33 = vector.load %arg5[%c2_24, %c0_25, %c0_26] : memref<3x1x32xf32, #tpu.memory_space<vmem>>, vector<1x1x32xf32>
    %34 = vector.shape_cast %33 : vector<1x1x32xf32> to vector<1x32xf32>
    %35 = vector.broadcast %34 : vector<1x32xf32> to vector<128x32xf32>
    %36 = arith.addf %32, %35 : vector<128x32xf32>
    %cst_27 = arith.constant 0.000000e+00 : f32
    %37 = vector.broadcast %cst_27 : f32 to vector<128x32xf32>
    %38 = arith.maximumf %36, %37 : vector<128x32xf32>
    %39 = arith.addf %8, %38 : vector<128x32xf32>
    %c0_28 = arith.constant 0 : index
    %c0_29 = arith.constant 0 : index
    %40 = vector.load %arg6[%c0_28, %c0_29] : memref<128x32xf32, #tpu.memory_space<vmem>>, vector<128x32xf32>
    tpu.vector_store %arg6[%c0_28, %c0_29], %39 {strides = array<i32>} : memref<128x32xf32, #tpu.memory_space<vmem>>, vector<128x32xf32>,
    return
  }
  func.func @transform_0(%arg0: i32) -> (i32, i32) {
    %c0_i32 = arith.constant 0 : i32
    %c0_i32_0 = arith.constant 0 : i32
    return %arg0, %c0_i32 : i32, i32
  }
  func.func @transform_1(%arg0: i32) -> (i32, i32) {
    %c0_i32 = arith.constant 0 : i32
    %c0_i32_0 = arith.constant 0 : i32
    %c0_i32_1 = arith.constant 0 : i32
    return %c0_i32, %c0_i32_0 : i32, i32
  }
  func.func @transform_2(%arg0: i32) -> (i32, i32) {
    %c0_i32 = arith.constant 0 : i32
    %c0_i32_0 = arith.constant 0 : i32
    %c0_i32_1 = arith.constant 0 : i32
    return %c0_i32, %c0_i32_0 : i32, i32
  }
  func.func @transform_3(%arg0: i32) -> (i32, i32, i32) {
    %c0_i32 = arith.constant 0 : i32
    %c0_i32_0 = arith.constant 0 : i32
    %c0_i32_1 = arith.constant 0 : i32
    %c0_i32_2 = arith.constant 0 : i32
    return %c0_i32, %c0_i32_0, %c0_i32_1 : i32, i32, i32
  }
  func.func @transform_4(%arg0: i32) -> (i32, i32, i32) {
    %c0_i32 = arith.constant 0 : i32
    %c0_i32_0 = arith.constant 0 : i32
    %c0_i32_1 = arith.constant 0 : i32
    %c0_i32_2 = arith.constant 0 : i32
    return %c0_i32, %c0_i32_0, %c0_i32_1 : i32, i32, i32
  }
  func.func @transform_5(%arg0: i32) -> (i32, i32) {
    %c0_i32 = arith.constant 0 : i32
    %c0_i32_0 = arith.constant 0 : i32
    return %arg0, %c0_i32 : i32, i32
  }
}

</mosaic_0001>

<llo_original>
// kernel: tpu_custom_call.1
$region0: #{tpu_custom_call.1}
  #allocation0 [shape = 'u32[]', space=smem, size = 0x4, offset = 0x4, fixed_abs, tag = 'smem constant byte address 0x4 - core index']
  #allocation1 [shape = 'u32[72,128]{1,0:T(1,128)}', space=vmem, size = 0x9000, scoped, tag = 'internal scratch']
  %s0 = inlined_call_operand.hbm [shape: f32[8,16], index: 0, kind: input, shape index: {}]
  %s1 = inlined_call_operand.hbm [shape: bf16[16,32], index: 1, kind: input, shape index: {}]
  %s2 = inlined_call_operand.hbm [shape: f32[1,32], index: 2, kind: input, shape index: {}]
  %s3 = inlined_call_operand.hbm [shape: bf16[3,32,32], index: 3, kind: input, shape index: {}]
  %s4 = inlined_call_operand.vmem [shape: f32[3,1,32], index: 4, kind: input, shape index: {}]
  %s5 = inlined_call_operand.hbm [shape: f32[8,32], index: 5, kind: output, shape index: {}]
  %s6 = sld [smem:[#allocation0]]
  $region46: #{tpu_custom_call.1} parent=0
    _
  %s8 = ssub.s32 1, %s6
  %s9 = scalar_select 0, %s8, %s6
  $region1: #{tpu_custom_call.1} parent=0
    #allocation2 [shape = 'u8[65536]{0}', space=vmem, size = 0x10000, scoped, tag = 'input window, operand 0, single buffered']
    #allocation3 [shape = 's32[1]{0}', space=sflag, size = 0x4, scoped, tag = 'scoped memory for tpu_custom_call.1']
    #allocation4 [shape = 's32[1]{0}', space=sflag, size = 0x4, scoped, tag = 'scoped memory for tpu_custom_call.1']
    #allocation5 [shape = 'u8[4096]{0}', space=vmem, size = 0x1000, scoped, tag = 'input window, operand 1, single buffered']
    #allocation6 [shape = 's32[1]{0}', space=sflag, size = 0x4, scoped, tag = 'scoped memory for tpu_custom_call.1']
    #allocation7 [shape = 'u8[512]{0}', space=vmem, size = 0x400, scoped, tag = 'input window, operand 2, single buffered']
    #allocation8 [shape = 'u8[24576]{0}', space=vmem, size = 0x6000, scoped, tag = 'input window, operand 3, single buffered']
    #allocation9 [shape = 's32[1]{0}', space=sflag, size = 0x4, scoped, tag = 'scoped memory for tpu_custom_call.1']
    #allocation10 [shape = 'u8[65536]{0}', space=vmem, size = 0x10000, scoped, tag = 'output window, operand 0, single buffered']
    %10 = vsyncpa [#allocation3], 0
    %11 = vsyncpa [#allocation6], 0
    %12 = vsyncpa [#allocation9], 0
    %13 = vsyncpa [#allocation4], 0
    // Predicated region
    $region2: #{tpu_custom_call.1} parent=1 // pred_check
      _
    $region3: #{tpu_custom_call.1} parent=1 // pred_check_branch
      %15 = sbr.rel (0) target = $region5
    $region4: #{tpu_custom_call.1} parent=1 // pred_region
      %17 = vsyncadd [#allocation3], 1920
      %s18 = sshll.u32 %s0, 4
      %s19 = int_to_ptr.hbm [resolvable:$true] %s18
      %s20 = sshll.u32 [#allocation2], 4
      %s21 = int_to_ptr.vmem [resolvable:$true] %s20
      %26 = dma.hbm_to_vmem [thread:$0]  %s19, 128, %s21, [#allocation3], 128, 128, 8
    $region5: #{tpu_custom_call.1} parent=1 // pred_fallthru
      _
    // Predicated region
    $region6: #{tpu_custom_call.1} parent=1 // pred_check
      _
    $region7: #{tpu_custom_call.1} parent=1 // pred_check_branch
      %28 = sbr.rel (0) target = $region9
    $region8: #{tpu_custom_call.1} parent=1 // pred_region
      %30 = vsyncadd [#allocation6], 0
      %s31 = sshll.u32 %s1, 4
      %s32 = int_to_ptr.hbm [resolvable:$true] %s31
      %s33 = sshll.u32 [#allocation5], 4
      %s34 = int_to_ptr.vmem [resolvable:$true] %s33
      %39 = dma.hbm_to_vmem [thread:$0]  %s32, 128, %s34, [#allocation6], 64, 64, 4
    $region9: #{tpu_custom_call.1} parent=1 // pred_fallthru
      _
    // Predicated region
    $region10: #{tpu_custom_call.1} parent=1 // pred_check
      _
    $region11: #{tpu_custom_call.1} parent=1 // pred_check_branch
      %41 = sbr.rel (0) target = $region13
    $region12: #{tpu_custom_call.1} parent=1 // pred_region
      %43 = vsyncadd [#allocation6], 0
      %s45 = sshll.u32 %s2, 4
      %s46 = int_to_ptr.hbm [resolvable:$true] %s45
      %s47 = sshll.u32 [#allocation7], 4
      %s48 = int_to_ptr.vmem [resolvable:$true] %s47
      %50 = dma.hbm_to_vmem [thread:$0]  %s46, 16, %s48, [#allocation6]
    $region13: #{tpu_custom_call.1} parent=1 // pred_fallthru
      _
    // Predicated region
    $region14: #{tpu_custom_call.1} parent=1 // pred_check
      _
    $region15: #{tpu_custom_call.1} parent=1 // pred_check_branch
      %52 = sbr.rel (0) target = $region17
    $region16: #{tpu_custom_call.1} parent=1 // pred_region
      %54 = vsyncadd [#allocation9], 0
      %s55 = sshll.u32 %s3, 4
      %s56 = int_to_ptr.hbm [resolvable:$true] %s55
      %s57 = sshll.u32 [#allocation8], 4
      %s58 = int_to_ptr.vmem [resolvable:$true] %s57
      %63 = dma.hbm_to_vmem [thread:$0]  %s56, 768, %s58, [#allocation9], 64, 64, 4
    $region17: #{tpu_custom_call.1} parent=1 // pred_fallthru
      _
    // Predicated region
    $region18: #{tpu_custom_call.1} parent=1 // pred_check
      _
    $region19: #{tpu_custom_call.1} parent=1 // pred_check_branch
      %65 = sbr.rel (0) target = $region21
    $region20: #{tpu_custom_call.1} parent=1 // pred_region
      _
    $region21: #{tpu_custom_call.1} parent=1 // pred_fallthru
      _
    // Predicated region
    $region22: #{tpu_custom_call.1} parent=1 // pred_check
      _
    $region23: #{tpu_custom_call.1} parent=1 // pred_check_branch
      %67 = sbr.rel (0) target = $region25
    $region24: #{tpu_custom_call.1} parent=1 // pred_region
      %69 = dma.done [#allocation3], 2048
    $region25: #{tpu_custom_call.1} parent=1 // pred_fallthru
      _
    // Predicated region
    $region26: #{tpu_custom_call.1} parent=1 // pred_check
      _
    $region27: #{tpu_custom_call.1} parent=1 // pred_check_branch
      %71 = sbr.rel (0) target = $region29
    $region28: #{tpu_custom_call.1} parent=1 // pred_region
      %73 = dma.done [#allocation6], 128
    $region29: #{tpu_custom_call.1} parent=1 // pred_fallthru
      _
    // Predicated region
    $region30: #{tpu_custom_call.1} parent=1 // pred_check
      _
    $region31: #{tpu_custom_call.1} parent=1 // pred_check_branch
      %75 = sbr.rel (0) target = $region33
    $region32: #{tpu_custom_call.1} parent=1 // pred_region
      %77 = dma.done [#allocation6], 16
    $region33: #{tpu_custom_call.1} parent=1 // pred_fallthru
      _
    // Predicated region
    $region34: #{tpu_custom_call.1} parent=1 // pred_check
      _
    $region35: #{tpu_custom_call.1} parent=1 // pred_check_branch
      %79 = sbr.rel (0) target = $region37
    $region36: #{tpu_custom_call.1} parent=1 // pred_region
      %81 = dma.done [#allocation9], 768
    $region37: #{tpu_custom_call.1} parent=1 // pred_fallthru
      _
    %v83 = vld [vmem:[#allocation2] sm:$0xff]
    %v84 = vld [vmem:[#allocation2 + $0x8] sm:$0xff]
    %v85 = vld [vmem:[#allocation2 + $0x10] sm:$0xff]
    %v86 = vld [vmem:[#allocation2 + $0x18] sm:$0xff]
    %v87 = vld [vmem:[#allocation2 + $0x20] sm:$0xff]
    %v88 = vld [vmem:[#allocation2 + $0x28] sm:$0xff]
    %v89 = vld [vmem:[#allocation2 + $0x30] sm:$0xff]
    %v90 = vld [vmem:[#allocation2 + $0x38] sm:$0xff]
    %v91 = vld [vmem:[#allocation2 + $0x40] sm:$0xff]
    %v92 = vld [vmem:[#allocation2 + $0x48] sm:$0xff]
    %v93 = vld [vmem:[#allocation2 + $0x50] sm:$0xff]
    %v94 = vld [vmem:[#allocation2 + $0x58] sm:$0xff]
    %v95 = vld [vmem:[#allocation2 + $0x60] sm:$0xff]
    %v96 = vld [vmem:[#allocation2 + $0x68] sm:$0xff]
    %v97 = vld [vmem:[#allocation2 + $0x70] sm:$0xff]
    %v98 = vld [vmem:[#allocation2 + $0x78] sm:$0xff]
    %v99 = vpack.c.bf16 %v84, %v83
    %v100 = vpack.c.bf16 %v86, %v85
    %v101 = vpack.c.bf16 %v88, %v87
    %v102 = vpack.c.bf16 %v90, %v89
    %v103 = vpack.c.bf16 %v92, %v91
    %v104 = vpack.c.bf16 %v94, %v93
    %v105 = vpack.c.bf16 %v96, %v95
    %v106 = vpack.c.bf16 %v98, %v97
    %v107 = vld [vmem:[#allocation5] sm:$0xf]
    %v108 = vld [vmem:[#allocation5 + $0x4] sm:$0xf]
    %v109 = vld [vmem:[#allocation7] sm:$0x1]
    %v111 = vperm.slane %v109, 0
    %v115 = vunpack.c.l.b16 %v107
    %v116 = vunpack.c.l.b16 %v108
    %v117 = vpack.c.b16 %v116, %v115
    %vm119 = vcmask 130048
    %v121 = vsel %vm119, %v99, 0
    %v124 = vsel %vm119, %v100, 0
    %v127 = vsel %vm119, %v101, 0
    %v130 = vsel %vm119, %v102, 0
    %v133 = vsel %vm119, %v103, 0
    %v136 = vsel %vm119, %v104, 0
    %v139 = vsel %vm119, %v105, 0
    %v142 = vsel %vm119, %v106, 0
    %144 = vmatpush.bf16.msra.mxu0 0
    %145 = vmatpush.bf16.msra.mxu0 0
    %146 = vmatpush.bf16.msra.mxu0 0
    %147 = vmatpush.bf16.msra.mxu0 0
    %148 = vmatpush.bf16.msra.mxu0 0
    %149 = vmatpush.bf16.msra.mxu0 0
    %150 = vmatpush.bf16.msra.mxu0 0
    %151 = vmatpush.bf16.msra.mxu0 %v117
    %152 = vmatmul.bf16.gmra.mxu0 %v121
    %v153 = vpop.f32.mrf.mxu0
    %v154 = vadd.f32 %v111, %v153
    %v155 = vpop.f32.mrf.mxu0
    %v156 = vadd.f32 %v111, %v155
    %157 = vmatmul.bf16.gmra.mxu0 %v124
    %v158 = vpop.f32.mrf.mxu0
    %v159 = vadd.f32 %v111, %v158
    %v160 = vpop.f32.mrf.mxu0
    %v161 = vadd.f32 %v111, %v160
    %162 = vmatmul.bf16.gmra.mxu0 %v127
    %v163 = vpop.f32.mrf.mxu0
    %v164 = vadd.f32 %v111, %v163
    %v165 = vpop.f32.mrf.mxu0
    %v166 = vadd.f32 %v111, %v165
    %167 = vmatmul.bf16.gmra.mxu0 %v130
    %v168 = vpop.f32.mrf.mxu0
    %v169 = vadd.f32 %v111, %v168
    %v170 = vpop.f32.mrf.mxu0
    %v171 = vadd.f32 %v111, %v170
    %172 = vmatmul.bf16.gmra.mxu0 %v133
    %v173 = vpop.f32.mrf.mxu0
    %v174 = vadd.f32 %v111, %v173
    %v175 = vpop.f32.mrf.mxu0
    %v176 = vadd.f32 %v111, %v175
    %177 = vmatmul.bf16.gmra.mxu0 %v136
    %v178 = vpop.f32.mrf.mxu0
    %v179 = vadd.f32 %v111, %v178
    %v180 = vpop.f32.mrf.mxu0
    %v181 = vadd.f32 %v111, %v180
    %182 = vmatmul.bf16.gmra.mxu0 %v139
    %v183 = vpop.f32.mrf.mxu0
    %v184 = vadd.f32 %v111, %v183
    %v185 = vpop.f32.mrf.mxu0
    %v186 = vadd.f32 %v111, %v185
    %187 = vmatmul.bf16.gmra.mxu0 %v142
    %v188 = vpop.f32.mrf.mxu0
    %v189 = vadd.f32 %v111, %v188
    %v190 = vpop.f32.mrf.mxu0
    %v191 = vadd.f32 %v111, %v190
    %192 = vdwg.mxu0
    %v193 = vmax.f32 %v154, 0.0
    %v194 = vmax.f32 %v156, 0.0
    %v195 = vmax.f32 %v159, 0.0
    %v196 = vmax.f32 %v161, 0.0
    %v197 = vmax.f32 %v164, 0.0
    %v198 = vmax.f32 %v166, 0.0
    %v199 = vmax.f32 %v169, 0.0
    %v200 = vmax.f32 %v171, 0.0
    %v201 = vmax.f32 %v174, 0.0
    %v202 = vmax.f32 %v176, 0.0
    %v203 = vmax.f32 %v179, 0.0
    %v204 = vmax.f32 %v181, 0.0
    %v205 = vmax.f32 %v184, 0.0
    %v206 = vmax.f32 %v186, 0.0
    %v207 = vmax.f32 %v189, 0.0
    %v208 = vmax.f32 %v191, 0.0
    %v209 = vpack.c.bf16 %v194, %v193
    %v210 = vpack.c.bf16 %v196, %v195
    %v211 = vpack.c.bf16 %v198, %v197
    %v212 = vpack.c.bf16 %v200, %v199
    %v213 = vpack.c.bf16 %v202, %v201
    %v214 = vpack.c.bf16 %v204, %v203
    %v215 = vpack.c.bf16 %v206, %v205
    %v216 = vpack.c.bf16 %v208, %v207
    %v217 = vld [vmem:[#allocation8] sm:$0xf]
    %v218 = vld [vmem:[#allocation8 + $0x4] sm:$0xf]
    %v219 = vld [vmem:[#allocation8 + $0x8] sm:$0xf]
    %v220 = vld [vmem:[#allocation8 + $0xc] sm:$0xf]
    %v221 = vld [vmem:[%s4] sm:$0x1]
    %v223 = vperm.slane %v221, 0
    %v229 = vunpack.c.l.b16 %v217
    %v230 = vunpack.c.l.b16 %v218
    %v231 = vunpack.c.l.b16 %v219
    %v232 = vunpack.c.l.b16 %v220
    %v233 = vpack.c.b16 %v230, %v229
    %v234 = vpack.c.b16 %v232, %v231
    %vm237 = vcmask 261120
    %v239 = vsel %vm237, %v209, 0
    %v242 = vsel %vm237, %v210, 0
    %v245 = vsel %vm237, %v211, 0
    %v248 = vsel %vm237, %v212, 0
    %v251 = vsel %vm237, %v213, 0
    %v254 = vsel %vm237, %v214, 0
    %v257 = vsel %vm237, %v215, 0
    %v260 = vsel %vm237, %v216, 0
    %262 = vmatpush.bf16.msra.mxu0 0
    %263 = vmatpush.bf16.msra.mxu0 0
    %264 = vmatpush.bf16.msra.mxu0 0
    %265 = vmatpush.bf16.msra.mxu0 0
    %266 = vmatpush.bf16.msra.mxu0 0
    %267 = vmatpush.bf16.msra.mxu0 0
    %268 = vmatpush.bf16.msra.mxu0 %v234
    %269 = vmatpush.bf16.msra.mxu0 %v233
    %270 = vmatmul.bf16.gmra.mxu0 %v239
    %v271 = vpop.f32.mrf.mxu0
    %v272 = vadd.f32 %v223, %v271
    %v273 = vpop.f32.mrf.mxu0
    %v274 = vadd.f32 %v223, %v273
    %275 = vmatmul.bf16.gmra.mxu0 %v242
    %v276 = vpop.f32.mrf.mxu0
    %v277 = vadd.f32 %v223, %v276
    %v278 = vpop.f32.mrf.mxu0
    %v279 = vadd.f32 %v223, %v278
    %280 = vmatmul.bf16.gmra.mxu0 %v245
    %v281 = vpop.f32.mrf.mxu0
    %v282 = vadd.f32 %v223, %v281
    %v283 = vpop.f32.mrf.mxu0
    %v284 = vadd.f32 %v223, %v283
    %285 = vmatmul.bf16.gmra.mxu0 %v248
    %v286 = vpop.f32.mrf.mxu0
    %v287 = vadd.f32 %v223, %v286
    %v288 = vpop.f32.mrf.mxu0
    %v289 = vadd.f32 %v223, %v288
    %290 = vmatmul.bf16.gmra.mxu0 %v251
    %v291 = vpop.f32.mrf.mxu0
    %v292 = vadd.f32 %v223, %v291
    %v293 = vpop.f32.mrf.mxu0
    %v294 = vadd.f32 %v223, %v293
    %295 = vmatmul.bf16.gmra.mxu0 %v254
    %v296 = vpop.f32.mrf.mxu0
    %v297 = vadd.f32 %v223, %v296
    %v298 = vpop.f32.mrf.mxu0
    %v299 = vadd.f32 %v223, %v298
    %300 = vmatmul.bf16.gmra.mxu0 %v257
    %v301 = vpop.f32.mrf.mxu0
    %v302 = vadd.f32 %v223, %v301
    %v303 = vpop.f32.mrf.mxu0
    %v304 = vadd.f32 %v223, %v303
    %305 = vmatmul.bf16.gmra.mxu0 %v260
    %v306 = vpop.f32.mrf.mxu0
    %v307 = vadd.f32 %v223, %v306
    %v308 = vpop.f32.mrf.mxu0
    %v309 = vadd.f32 %v223, %v308
    %310 = vdwg.mxu0
    %v311 = vmax.f32 %v272, 0.0
    %v312 = vmax.f32 %v274, 0.0
    %v313 = vmax.f32 %v277, 0.0
    %v314 = vmax.f32 %v279, 0.0
    %v315 = vmax.f32 %v282, 0.0
    %v316 = vmax.f32 %v284, 0.0
    %v317 = vmax.f32 %v287, 0.0
    %v318 = vmax.f32 %v289, 0.0
    %v319 = vmax.f32 %v292, 0.0
    %v320 = vmax.f32 %v294, 0.0
    %v321 = vmax.f32 %v297, 0.0
    %v322 = vmax.f32 %v299, 0.0
    %v323 = vmax.f32 %v302, 0.0
    %v324 = vmax.f32 %v304, 0.0
    %v325 = vmax.f32 %v307, 0.0
    %v326 = vmax.f32 %v309, 0.0
    %v327 = vpack.c.bf16 %v312, %v311
    %v328 = vpack.c.bf16 %v314, %v313
    %v329 = vpack.c.bf16 %v316, %v315
    %v330 = vpack.c.bf16 %v318, %v317
    %v331 = vpack.c.bf16 %v320, %v319
    %v332 = vpack.c.bf16 %v322, %v321
    %v333 = vpack.c.bf16 %v324, %v323
    %v334 = vpack.c.bf16 %v326, %v325
    %s335 = scalar_lea.vmem [#allocation8], 16
    %v336 = vld [vmem:[%s335] sm:$0xf]
    %v337 = vld [vmem:[%s335 + $0x4] sm:$0xf]
    %v338 = vld [vmem:[%s335 + $0x8] sm:$0xf]
    %v339 = vld [vmem:[%s335 + $0xc] sm:$0xf]
    %s340 = scalar_lea.vmem %s4, 1
    %v341 = vld [vmem:[%s340] sm:$0x1]
    %v343 = vperm.slane %v341, 0
    %v349 = vunpack.c.l.b16 %v336
    %v350 = vunpack.c.l.b16 %v337
    %v351 = vunpack.c.l.b16 %v338
    %v352 = vunpack.c.l.b16 %v339
    %v353 = vpack.c.b16 %v350, %v349
    %v354 = vpack.c.b16 %v352, %v351
    %v358 = vsel %vm237, %v327, 0
    %v361 = vsel %vm237, %v328, 0
    %v364 = vsel %vm237, %v329, 0
    %v367 = vsel %vm237, %v330, 0
    %v370 = vsel %vm237, %v331, 0
    %v373 = vsel %vm237, %v332, 0
    %v376 = vsel %vm237, %v333, 0
    %v379 = vsel %vm237, %v334, 0
    %381 = vmatpush.bf16.msra.mxu0 0
    %382 = vmatpush.bf16.msra.mxu0 0
    %383 = vmatpush.bf16.msra.mxu0 0
    %384 = vmatpush.bf16.msra.mxu0 0
    %385 = vmatpush.bf16.msra.mxu0 0
    %386 = vmatpush.bf16.msra.mxu0 0
    %387 = vmatpush.bf16.msra.mxu0 %v354
    %388 = vmatpush.bf16.msra.mxu0 %v353
    %389 = vmatmul.bf16.gmra.mxu0 %v358
    %v390 = vpop.f32.mrf.mxu0
    %v391 = vadd.f32 %v343, %v390
    %v392 = vpop.f32.mrf.mxu0
    %v393 = vadd.f32 %v343, %v392
    %394 = vmatmul.bf16.gmra.mxu0 %v361
    %v395 = vpop.f32.mrf.mxu0
    %v396 = vadd.f32 %v343, %v395
    %v397 = vpop.f32.mrf.mxu0
    %v398 = vadd.f32 %v343, %v397
    %399 = vmatmul.bf16.gmra.mxu0 %v364
    %v400 = vpop.f32.mrf.mxu0
    %v401 = vadd.f32 %v343, %v400
    %v402 = vpop.f32.mrf.mxu0
    %v403 = vadd.f32 %v343, %v402
    %404 = vmatmul.bf16.gmra.mxu0 %v367
    %v405 = vpop.f32.mrf.mxu0
    %v406 = vadd.f32 %v343, %v405
    %v407 = vpop.f32.mrf.mxu0
    %v408 = vadd.f32 %v343, %v407
    %409 = vmatmul.bf16.gmra.mxu0 %v370
    %v410 = vpop.f32.mrf.mxu0
    %v411 = vadd.f32 %v343, %v410
    %v412 = vpop.f32.mrf.mxu0
    %v413 = vadd.f32 %v343, %v412
    %414 = vmatmul.bf16.gmra.mxu0 %v373
    %v415 = vpop.f32.mrf.mxu0
    %v416 = vadd.f32 %v343, %v415
    %v417 = vpop.f32.mrf.mxu0
    %v418 = vadd.f32 %v343, %v417
    %419 = vmatmul.bf16.gmra.mxu0 %v376
    %v420 = vpop.f32.mrf.mxu0
    %v421 = vadd.f32 %v343, %v420
    %v422 = vpop.f32.mrf.mxu0
    %v423 = vadd.f32 %v343, %v422
    %424 = vmatmul.bf16.gmra.mxu0 %v379
    %v425 = vpop.f32.mrf.mxu0
    %v426 = vadd.f32 %v343, %v425
    %v427 = vpop.f32.mrf.mxu0
    %v428 = vadd.f32 %v343, %v427
    %429 = vdwg.mxu0
    %v430 = vmax.f32 %v391, 0.0
    %v431 = vmax.f32 %v393, 0.0
    %v432 = vmax.f32 %v396, 0.0
    %v433 = vmax.f32 %v398, 0.0
    %v434 = vmax.f32 %v401, 0.0
    %v435 = vmax.f32 %v403, 0.0
    %v436 = vmax.f32 %v406, 0.0
    %v437 = vmax.f32 %v408, 0.0
    %v438 = vmax.f32 %v411, 0.0
    %v439 = vmax.f32 %v413, 0.0
    %v440 = vmax.f32 %v416, 0.0
    %v441 = vmax.f32 %v418, 0.0
    %v442 = vmax.f32 %v421, 0.0
    %v443 = vmax.f32 %v423, 0.0
    %v444 = vmax.f32 %v426, 0.0
    %v445 = vmax.f32 %v428, 0.0
    %v446 = vpack.c.bf16 %v431, %v430
    %v447 = vpack.c.bf16 %v433, %v432
    %v448 = vpack.c.bf16 %v435, %v434
    %v449 = vpack.c.bf16 %v437, %v436
    %v450 = vpack.c.bf16 %v439, %v438
    %v451 = vpack.c.bf16 %v441, %v440
    %v452 = vpack.c.bf16 %v443, %v442
    %v453 = vpack.c.bf16 %v445, %v444
    %s454 = scalar_lea.vmem [#allocation8], 32
    %v455 = vld [vmem:[%s454] sm:$0xf]
    %v456 = vld [vmem:[%s454 + $0x4] sm:$0xf]
    %v457 = vld [vmem:[%s454 + $0x8] sm:$0xf]
    %v458 = vld [vmem:[%s454 + $0xc] sm:$0xf]
    %s459 = scalar_lea.vmem %s4, 2
    %v460 = vld [vmem:[%s459] sm:$0x1]
    %v462 = vperm.slane %v460, 0
    %v468 = vunpack.c.l.b16 %v455
    %v469 = vunpack.c.l.b16 %v456
    %v470 = vunpack.c.l.b16 %v457
    %v471 = vunpack.c.l.b16 %v458
    %v472 = vpack.c.b16 %v469, %v468
    %v473 = vpack.c.b16 %v471, %v470
    %v477 = vsel %vm237, %v446, 0
    %v480 = vsel %vm237, %v447, 0
    %v483 = vsel %vm237, %v448, 0
    %v486 = vsel %vm237, %v449, 0
    %v489 = vsel %vm237, %v450, 0
    %v492 = vsel %vm237, %v451, 0
    %v495 = vsel %vm237, %v452, 0
    %v498 = vsel %vm237, %v453, 0
    %500 = vmatpush.bf16.msra.mxu0 0
    %501 = vmatpush.bf16.msra.mxu0 0
    %502 = vmatpush.bf16.msra.mxu0 0
    %503 = vmatpush.bf16.msra.mxu0 0
    %504 = vmatpush.bf16.msra.mxu0 0
    %505 = vmatpush.bf16.msra.mxu0 0
    %506 = vmatpush.bf16.msra.mxu0 %v473
    %507 = vmatpush.bf16.msra.mxu0 %v472
    %508 = vmatmul.bf16.gmra.mxu0 %v477
    %v509 = vpop.f32.mrf.mxu0
    %v510 = vadd.f32 %v462, %v509
    %v511 = vpop.f32.mrf.mxu0
    %v512 = vadd.f32 %v462, %v511
    %513 = vmatmul.bf16.gmra.mxu0 %v480
    %v514 = vpop.f32.mrf.mxu0
    %v515 = vadd.f32 %v462, %v514
    %v516 = vpop.f32.mrf.mxu0
    %v517 = vadd.f32 %v462, %v516
    %518 = vmatmul.bf16.gmra.mxu0 %v483
    %v519 = vpop.f32.mrf.mxu0
    %v520 = vadd.f32 %v462, %v519
    %v521 = vpop.f32.mrf.mxu0
    %v522 = vadd.f32 %v462, %v521
    %523 = vmatmul.bf16.gmra.mxu0 %v486
    %v524 = vpop.f32.mrf.mxu0
    %v525 = vadd.f32 %v462, %v524
    %v526 = vpop.f32.mrf.mxu0
    %v527 = vadd.f32 %v462, %v526
    %528 = vmatmul.bf16.gmra.mxu0 %v489
    %v529 = vpop.f32.mrf.mxu0
    %v530 = vadd.f32 %v462, %v529
    %v531 = vpop.f32.mrf.mxu0
    %v532 = vadd.f32 %v462, %v531
    %533 = vmatmul.bf16.gmra.mxu0 %v492
    %v534 = vpop.f32.mrf.mxu0
    %v535 = vadd.f32 %v462, %v534
    %v536 = vpop.f32.mrf.mxu0
    %v537 = vadd.f32 %v462, %v536
    %538 = vmatmul.bf16.gmra.mxu0 %v495
    %v539 = vpop.f32.mrf.mxu0
    %v540 = vadd.f32 %v462, %v539
    %v541 = vpop.f32.mrf.mxu0
    %v542 = vadd.f32 %v462, %v541
    %543 = vmatmul.bf16.gmra.mxu0 %v498
    %v544 = vpop.f32.mrf.mxu0
    %v545 = vadd.f32 %v462, %v544
    %v546 = vpop.f32.mrf.mxu0
    %v547 = vadd.f32 %v462, %v546
    %548 = vdwg.mxu0
    %v549 = vmax.f32 %v510, 0.0
    %v550 = vmax.f32 %v512, 0.0
    %v551 = vmax.f32 %v515, 0.0
    %v552 = vmax.f32 %v517, 0.0
    %v553 = vmax.f32 %v520, 0.0
    %v554 = vmax.f32 %v522, 0.0
    %v555 = vmax.f32 %v525, 0.0
    %v556 = vmax.f32 %v527, 0.0
    %v557 = vmax.f32 %v530, 0.0
    %v558 = vmax.f32 %v532, 0.0
    %v559 = vmax.f32 %v535, 0.0
    %v560 = vmax.f32 %v537, 0.0
    %v561 = vmax.f32 %v540, 0.0
    %v562 = vmax.f32 %v542, 0.0
    %v563 = vmax.f32 %v545, 0.0
    %v564 = vmax.f32 %v547, 0.0
    %v565 = vadd.f32 %v193, %v549
    %v566 = vadd.f32 %v194, %v550
    %v567 = vadd.f32 %v195, %v551
    %v568 = vadd.f32 %v196, %v552
    %v569 = vadd.f32 %v197, %v553
    %v570 = vadd.f32 %v198, %v554
    %v571 = vadd.f32 %v199, %v555
    %v572 = vadd.f32 %v200, %v556
    %v573 = vadd.f32 %v201, %v557
    %v574 = vadd.f32 %v202, %v558
    %v575 = vadd.f32 %v203, %v559
    %v576 = vadd.f32 %v204, %v560
    %v577 = vadd.f32 %v205, %v561
    %v578 = vadd.f32 %v206, %v562
    %v579 = vadd.f32 %v207, %v563
    %v580 = vadd.f32 %v208, %v564
    %581 = vst.msk [vmem:[#allocation10] sm:$0xff] %vm237, %v565
    %582 = vst.msk [vmem:[#allocation10 + $0x8] sm:$0xff] %vm237, %v566
    %583 = vst.msk [vmem:[#allocation10 + $0x10] sm:$0xff] %vm237, %v567
    %584 = vst.msk [vmem:[#allocation10 + $0x18] sm:$0xff] %vm237, %v568
    %585 = vst.msk [vmem:[#allocation10 + $0x20] sm:$0xff] %vm237, %v569
    %586 = vst.msk [vmem:[#allocation10 + $0x28] sm:$0xff] %vm237, %v570
    %587 = vst.msk [vmem:[#allocation10 + $0x30] sm:$0xff] %vm237, %v571
    %588 = vst.msk [vmem:[#allocation10 + $0x38] sm:$0xff] %vm237, %v572
    %589 = vst.msk [vmem:[#allocation10 + $0x40] sm:$0xff] %vm237, %v573
    %590 = vst.msk [vmem:[#allocation10 + $0x48] sm:$0xff] %vm237, %v574
    %591 = vst.msk [vmem:[#allocation10 + $0x50] sm:$0xff] %vm237, %v575
    %592 = vst.msk [vmem:[#allocation10 + $0x58] sm:$0xff] %vm237, %v576
    %593 = vst.msk [vmem:[#allocation10 + $0x60] sm:$0xff] %vm237, %v577
    %594 = vst.msk [vmem:[#allocation10 + $0x68] sm:$0xff] %vm237, %v578
    %595 = vst.msk [vmem:[#allocation10 + $0x70] sm:$0xff] %vm237, %v579
    %596 = vst.msk [vmem:[#allocation10 + $0x78] sm:$0xff] %vm237, %v580
    // Predicated region
    $region38: #{tpu_custom_call.1} parent=1 // pred_check
      _
    $region39: #{tpu_custom_call.1} parent=1 // pred_check_branch
      %598 = sbr.rel (0) target = $region41
    $region40: #{tpu_custom_call.1} parent=1 // pred_region
      %600 = vsyncadd [#allocation4], 1920
      %s601 = sshll.u32 [#allocation10], 4
      %s602 = int_to_ptr.vmem [resolvable:$true] %s601
      %s603 = sshll.u32 %s5, 4
      %s604 = int_to_ptr.hbm [resolvable:$true] %s603
      %609 = dma.vmem_to_hbm [thread:$0]  %s602, 128, %s604, [#allocation4], 128, 128, 8
    $region41: #{tpu_custom_call.1} parent=1 // pred_fallthru
      _
    // Predicated region
    $region42: #{tpu_custom_call.1} parent=1 // pred_check
      _
    $region43: #{tpu_custom_call.1} parent=1 // pred_check_branch
      %611 = sbr.rel (0) target = $region45
    $region44: #{tpu_custom_call.1} parent=1 // pred_region
      %613 = dma.done [#allocation4], 2048
    $region45: #{tpu_custom_call.1} parent=1 // pred_fallthru
      _
    %614 = vsyncpa [#allocation3], 1
    %615 = vsyncpa [#allocation6], 1
    %616 = vsyncpa [#allocation9], 1
    %617 = vsyncpa [#allocation4], 1

</llo_original>
